<compile_context>
chip_gen: v7x
topology: tpu7x:2x2x1
jax: 0.10.0
libtpu: 0.0.40
codegen_flags: <defaults>
</compile_context>

<pallas_src>
import functools

import jax
import jax.numpy as jnp
from jax.experimental import pallas as pl
from jax.experimental.pallas import tpu as pltpu


def _round_up(x: int, m: int) -> int:
    return ((x + m - 1) // m) * m


def _dense_relu_kernel(x_ref, w_ref, b_ref, o_ref, acc_ref):
    """One (tm, tn) output tile, accumulated over the K grid axis."""
    k = pl.program_id(2)

    @pl.when(k == 0)
    def _():
        acc_ref[...] = jnp.zeros_like(acc_ref)

    # Steady state: pure MXU matmul-accumulate in f32.
    acc_ref[...] += jnp.dot(
        x_ref[...], w_ref[...], preferred_element_type=jnp.float32
    )

    # Finalize: bias + ReLU epilogue only on the last K step.
    @pl.when(k == pl.num_programs(2) - 1)
    def _():
        acc = acc_ref[...] + b_ref[...].astype(jnp.float32)  # (1, tn) broadcasts
        o_ref[...] = jnp.maximum(acc, 0.0).astype(o_ref.dtype)


@functools.partial(jax.jit, static_argnames=("tm_cap", "tn_cap", "tk_cap"))
def base_model_forward(x, w, b, *, tm_cap=256, tn_cap=256, tk_cap=256):
    """Pallas wrapper for the BaseModel forward hot path.

    x: [B, Din] float32
    w: [Din, Dout] float32
    b: [Dout] float32
    returns: [B, Dout] float32  == relu(x @ w + b)
    """
    B, Din = x.shape
    Dout = w.shape[1]

    # Tile sizes: lane axes (tk for x, tn for w/out/bias) multiples of 128,
    # sublane axis (tm) multiple of 8.  Caps keep per-step VMEM tiny
    # (<= 256*256*4B = 256 KiB per tile) so double buffering always fits
    # even on v7x's 64 MiB VMEM.
    tm = min(tm_cap, _round_up(B, 8))
    tn = min(tn_cap, _round_up(Dout, 128))
    tk = min(tk_cap, _round_up(Din, 128))

    M = _round_up(B, tm)
    N = _round_up(Dout, tn)
    K = _round_up(Din, tk)

    # Zero-pad to tile multiples (zero K-padding contributes nothing to the
    # matmul; padded N columns are sliced off at the end).
    x_p = jnp.pad(x, ((0, M - B), (0, K - Din)))
    w_p = jnp.pad(w, ((0, K - Din), (0, N - Dout)))
    b_p = jnp.pad(b, (0, N - Dout)).reshape(1, N)

    grid = (M // tm, N // tn, K // tk)

    out_p = pl.pallas_call(
        _dense_relu_kernel,
        out_shape=jax.ShapeDtypeStruct((M, N), x.dtype),
        grid_spec=pltpu.PrefetchScalarGridSpec(
            num_scalar_prefetch=0,
            grid=grid,
            in_specs=[
                pl.BlockSpec((tm, tk), lambda i, j, k: (i, k)),   # x tile
                pl.BlockSpec((tk, tn), lambda i, j, k: (k, j)),   # w tile
                pl.BlockSpec((1, tn), lambda i, j, k: (0, j)),    # bias tile
            ],
            out_specs=pl.BlockSpec((tm, tn), lambda i, j, k: (i, j)),
            scratch_shapes=[pltpu.VMEM((tm, tn), jnp.float32)],
        ),
        compiler_params=pltpu.CompilerParams(
            dimension_semantics=("parallel", "parallel", "arbitrary"),
        ),
        cost_estimate=pl.CostEstimate(
            flops=2 * M * N * K,
            transcendentals=0,
            bytes_accessed=(M * K + K * N + N + M * N) * 4,
        ),
    )(x_p, w_p, b_p)

    return out_p[:B, :Dout]


if __name__ == "__main__":
    # Small shapes consistent with a generic dense model body.  Din is chosen
    # so the padded K (512) spans two K grid steps, exercising the
    # accumulate / finalize path; Dout pads to one lane-dense 256-wide tile.
    batch, in_features, out_features = 8, 320, 160

    key = jax.random.PRNGKey(0)
    kx, kw, kb = jax.random.split(key, 3)

    # Deterministic synthetic parameters (no checkpoint load).
    x = jax.random.normal(kx, (batch, in_features), dtype=jnp.float32)
    w = jax.random.normal(kw, (in_features, out_features), dtype=jnp.float32) * 0.05
    b = jax.random.normal(kb, (out_features,), dtype=jnp.float32) * 0.01

    out = base_model_forward(x, w, b)
    out = jax.block_until_ready(out)

    # Reference check in plain JAX (same semantics as the kernel).
    ref = jnp.maximum(x @ w + b, 0.0)
    assert out.shape == (batch, out_features)
    assert jnp.allclose(out, ref, atol=1e-4, rtol=1e-4)

    print("KERNEL_OK")
</pallas_src>

<mosaic_0001>
module attributes {stable_mosaic.version = 11 : i64} {
  func.func @_dense_relu_kernel(%arg0: i32, %arg1: i32, %arg2: i32, %arg3: memref<8x256xf32, #tpu.memory_space<vmem>>, %arg4: memref<256x256xf32, #tpu.memory_space<vmem>>, %arg5: memref<1x256xf32, #tpu.memory_space<vmem>>, %arg6: memref<8x256xf32, #tpu.memory_space<vmem>>, %arg7: memref<8x256xf32, #tpu.memory_space<vmem>>) attributes {dimension_semantics = [#tpu.dimension_semantics<parallel>, #tpu.dimension_semantics<parallel>, #tpu.dimension_semantics<arbitrary>], iteration_bounds = array<i64: 1, 1, 2>, scalar_prefetch = 0 : i64, scratch_operands = 1 : i64, tpu.core_type = #tpu.core_type<tc>, window_params = [{transform_indices = @transform_0, window_bounds = array<i64: 8, 256>}, {transform_indices = @transform_1, window_bounds = array<i64: 256, 256>}, {transform_indices = @transform_2, window_bounds = array<i64: 1, 256>}, {transform_indices = @transform_3, window_bounds = array<i64: 8, 256>}]} {
    %c0_i32 = arith.constant 0 : i32
    %0 = arith.cmpi eq, %arg2, %c0_i32 : i32
    %1 = arith.extui %0 : i1 to i32
    %c0_i32_0 = arith.constant 0 : i32
    %2 = arith.cmpi ne, %1, %c0_i32_0 : i32
    scf.if %2 {
      %cst_9 = arith.constant 0.000000e+00 : f32
      %12 = vector.broadcast %cst_9 : f32 to vector<8x256xf32>
      %c0_10 = arith.constant 0 : index
      %c0_11 = arith.constant 0 : index
      %13 = vector.load %arg7[%c0_10, %c0_11] : memref<8x256xf32, #tpu.memory_space<vmem>>, vector<8x256xf32>
      tpu.vector_store %arg7[%c0_10, %c0_11], %12 {strides = array<i32>} : memref<8x256xf32, #tpu.memory_space<vmem>>, vector<8x256xf32>,
    } else {
    }
    %c0 = arith.constant 0 : index
    %c0_1 = arith.constant 0 : index
    %3 = vector.load %arg7[%c0, %c0_1] : memref<8x256xf32, #tpu.memory_space<vmem>>, vector<8x256xf32>
    %c0_2 = arith.constant 0 : index
    %c0_3 = arith.constant 0 : index
    %4 = vector.load %arg3[%c0_2, %c0_3] : memref<8x256xf32, #tpu.memory_space<vmem>>, vector<8x256xf32>
    %c0_4 = arith.constant 0 : index
    %c0_5 = arith.constant 0 : index
    %5 = vector.load %arg4[%c0_4, %c0_5] : memref<256x256xf32, #tpu.memory_space<vmem>>, vector<256x256xf32>
    %cst = arith.constant dense<0.000000e+00> : vector<8x256xf32>
    %6 = tpu.matmul %4, %5, %cst {dimension_numbers = #tpu.dot_dimension_numbers<[1], [0], [0], [1], [0, 0, 1, 1], [], []>} : vector<8x256xf32>, vector<256x256xf32>, vector<8x256xf32> -> vector<8x256xf32>
    %7 = arith.addf %3, %6 : vector<8x256xf32>
    %c0_6 = arith.constant 0 : index
    %c0_7 = arith.constant 0 : index
    %8 = vector.load %arg7[%c0_6, %c0_7] : memref<8x256xf32, #tpu.memory_space<vmem>>, vector<8x256xf32>
    tpu.vector_store %arg7[%c0_6, %c0_7], %7 {strides = array<i32>} : memref<8x256xf32, #tpu.memory_space<vmem>>, vector<8x256xf32>,
    %c1_i32 = arith.constant 1 : i32
    %9 = arith.cmpi eq, %arg2, %c1_i32 : i32
    %10 = arith.extui %9 : i1 to i32
    %c0_i32_8 = arith.constant 0 : i32
    %11 = arith.cmpi ne, %10, %c0_i32_8 : i32
    scf.if %11 {
      %c0_9 = arith.constant 0 : index
      %c0_10 = arith.constant 0 : index
      %12 = vector.load %arg7[%c0_9, %c0_10] : memref<8x256xf32, #tpu.memory_space<vmem>>, vector<8x256xf32>
      %c0_11 = arith.constant 0 : index
      %c0_12 = arith.constant 0 : index
      %13 = vector.load %arg5[%c0_11, %c0_12] : memref<1x256xf32, #tpu.memory_space<vmem>>, vector<1x256xf32>
      %14 = vector.broadcast %13 : vector<1x256xf32> to vector<8x256xf32>
      %15 = arith.addf %12, %14 : vector<8x256xf32>
      %cst_13 = arith.constant 0.000000e+00 : f32
      %16 = vector.broadcast %cst_13 : f32 to vector<8x256xf32>
      %17 = arith.maximumf %15, %16 : vector<8x256xf32>
      %c0_14 = arith.constant 0 : index
      %c0_15 = arith.constant 0 : index
      %18 = vector.load %arg6[%c0_14, %c0_15] : memref<8x256xf32, #tpu.memory_space<vmem>>, vector<8x256xf32>
      tpu.vector_store %arg6[%c0_14, %c0_15], %17 {strides = array<i32>} : memref<8x256xf32, #tpu.memory_space<vmem>>, vector<8x256xf32>,
    } else {
    }
    return
  }
  func.func @transform_0(%arg0: i32, %arg1: i32, %arg2: i32) -> (i32, i32) {
    %c0_i32 = arith.constant 0 : i32
    return %arg0, %arg2 : i32, i32
  }
  func.func @transform_1(%arg0: i32, %arg1: i32, %arg2: i32) -> (i32, i32) {
    %c0_i32 = arith.constant 0 : i32
    return %arg2, %arg1 : i32, i32
  }
  func.func @transform_2(%arg0: i32, %arg1: i32, %arg2: i32) -> (i32, i32) {
    %c0_i32 = arith.constant 0 : i32
    %c0_i32_0 = arith.constant 0 : i32
    return %c0_i32, %arg1 : i32, i32
  }
  func.func @transform_3(%arg0: i32, %arg1: i32, %arg2: i32) -> (i32, i32) {
    %c0_i32 = arith.constant 0 : i32
    return %arg0, %arg1 : i32, i32
  }
}

</mosaic_0001>

<llo_original>
// kernel: base_model_forward.1
$region0: #{base_model_forward.1}
  #allocation0 [shape = 'u32[]', space=smem, size = 0x4, offset = 0x4, fixed_abs, tag = 'smem constant byte address 0x4 - core index']
  #allocation1 [shape = 'u32[144,128]{1,0:T(1,128)}', space=vmem, size = 0x12000, scoped, tag = 'internal scratch']
  #allocation2 [shape = 'f32[8,256]{1,0:T(8,128)}', space=vmem, size = 0x2000, scoped, tag = 'scratch operand']
  %s0 = inlined_call_operand.vmem [shape: f32[8,512], index: 0, kind: input, shape index: {}]
  %s1 = inlined_call_operand.vmem [shape: f32[512,256], index: 1, kind: input, shape index: {}]
  %s2 = inlined_call_operand.vmem [shape: f32[1,256], index: 2, kind: input, shape index: {}]
  %s3 = inlined_call_operand.hbm [shape: f32[8,256], index: 3, kind: output, shape index: {}]
  %s4 = sld [smem:[#allocation0]]
  $region53: #{base_model_forward.1} parent=0
    _
  %s6 = ssub.s32 1, %s4
  %s7 = scalar_select 0, %s6, %s4
  $region1: #{base_model_forward.1} parent=0
    #allocation3 [shape = 'u8[8192]{0}', space=vmem, size = 0x2000, scoped, tag = 'output window, operand 0, single buffered']
    #allocation4 [shape = 's32[2]{0}', space=sflag, size = 0x8, scoped, tag = 'scoped memory for base_model_forward.1']
    %8 = vsyncpa [#allocation4], 0
    loop: start=0, step=1, limit=4
    $region2: #{base_model_forward.1} parent=1 // loop_pre_header
      _
    $region3: #{base_model_forward.1} parent=1 // loop_header
      %s10 = sphi 0, %s14
      %p11 = scmp.ge.s32.totalorder %s10, 4
      %s17 = sphi 0, %s36
      %s18 = sphi 0, %s32
      %s19 = sphi 0, %s28
      %s20 = sphi 0, %s17
      %s21 = sphi 0, %s18
      %s22 = sphi 0, %s19
      %s23 = sphi 0, %s20
      %s24 = sphi 0, %s21
      %s25 = sphi 0, %s22
      %s41 = sphi 0, %s43
      %s44 = sphi 0, %s41
      %s45 = sphi 0, %s44
      %s61 = sphi 0, %s45
      %s69 = sphi 0, %s71
      %s72 = sphi 0, %s69
      %s73 = sphi 0, %s72
      %s89 = sphi 0, %s73
      %s95 = sphi 0, %s97
      %s98 = sphi 0, %s95
      %s99 = sphi 0, %s98
      %s115 = sphi 0, %s99
      %s123 = sphi 0, %s125
      %s126 = sphi 0, %s123
      %s127 = sphi 0, %s126
      %s143 = sphi 0, %s127
    $region4: #{base_model_forward.1} parent=1 // loop_header_branch
      %13 = sbr.rel (%p11) target = $region8
    $region5: #{base_model_forward.1} parent=1 // loop_body
      %s15 = ssub.s32 %s10, 1
      %s16 = ssub.s32 %s10, 2
      %s26 = sadd.s32 1, %s19
      %p27 = scmp.ge.s32.totalorder %s26, 2
      %s28 = scalar_select %p27, 0, %s26
      %s29 = sadd.s32 1, %s18
      %s30 = scalar_select %p27, %s29, %s18
      %p31 = scmp.ge.s32.totalorder %s30, 1
      %s32 = scalar_select %p31, 0, %s30
      %s33 = sadd.s32 1, %s17
      %s34 = scalar_select %p31, %s33, %s17
      %p35 = scmp.ge.s32.totalorder %s34, 1
      %s36 = scalar_select %p35, 0, %s34
      %s37 = ssub.s32 %s17, %s36
      %s38 = ssub.s32 %s19, %s28
      %s39 = sor.u32 %s37, %s38
      %p40 = scmp.eq.s32.totalorder %s39, 0
      %s42 = sadd.s32 %s41, 1
      %s43 = scalar_select %p40, %s41, %s42
      %p46 = pneg %p40
      %p47 = scmp.eq.s32.totalorder %s10, 1
      %p48 = por %p46, %p47
      %p49 = scmp.ne.s32.totalorder %s41, %s44
      %p50 = scmp.eq.s32.totalorder %s10, 0
      %p51 = por %p49, %p50
      %p52 = scmp.ne.s32.totalorder %s41, %s44
      %p53 = scmp.eq.s32.totalorder %s15, 1
      %p54 = por %p52, %p53
      %p55 = scmp.ne.s32.totalorder %s44, %s45
      %p56 = scmp.eq.s32.totalorder %s15, 0
      %p57 = por %p55, %p56
      %p58 = scmp.ne.s32.totalorder %s44, %s45
      %p59 = scmp.eq.s32.totalorder %s16, 1
      %p60 = por %p58, %p59
      %p62 = scmp.ne.s32.totalorder %s45, %s61
      %p63 = scmp.eq.s32.totalorder %s16, 0
      %p64 = por %p62, %p63
      %s65 = ssub.s32 %s19, %s28
      %s66 = ssub.s32 %s18, %s32
      %s67 = sor.u32 %s65, %s66
      %p68 = scmp.eq.s32.totalorder %s67, 0
      %s70 = sadd.s32 %s69, 1
      %s71 = scalar_select %p68, %s69, %s70
      %p74 = pneg %p68
      %p75 = scmp.eq.s32.totalorder %s10, 1
      %p76 = por %p74, %p75
      %p77 = scmp.ne.s32.totalorder %s69, %s72
      %p78 = scmp.eq.s32.totalorder %s10, 0
      %p79 = por %p77, %p78
      %p80 = scmp.ne.s32.totalorder %s69, %s72
      %p81 = scmp.eq.s32.totalorder %s15, 1
      %p82 = por %p80, %p81
      %p83 = scmp.ne.s32.totalorder %s72, %s73
      %p84 = scmp.eq.s32.totalorder %s15, 0
      %p85 = por %p83, %p84
      %p86 = scmp.ne.s32.totalorder %s72, %s73
      %p87 = scmp.eq.s32.totalorder %s16, 1
      %p88 = por %p86, %p87
      %p90 = scmp.ne.s32.totalorder %s73, %s89
      %p91 = scmp.eq.s32.totalorder %s16, 0
      %p92 = por %p90, %p91
      %s93 = ssub.s32 %s18, %s32
      %p94 = scmp.eq.s32.totalorder %s93, 0
      %s96 = sadd.s32 %s95, 1
      %s97 = scalar_select %p94, %s95, %s96
      %p100 = pneg %p94
      %p101 = scmp.eq.s32.totalorder %s10, 1
      %p102 = por %p100, %p101
      %p103 = scmp.ne.s32.totalorder %s95, %s98
      %p104 = scmp.eq.s32.totalorder %s10, 0
      %p105 = por %p103, %p104
      %p106 = scmp.ne.s32.totalorder %s95, %s98
      %p107 = scmp.eq.s32.totalorder %s15, 1
      %p108 = por %p106, %p107
      %p109 = scmp.ne.s32.totalorder %s98, %s99
      %p110 = scmp.eq.s32.totalorder %s15, 0
      %p111 = por %p109, %p110
      %p112 = scmp.ne.s32.totalorder %s98, %s99
      %p113 = scmp.eq.s32.totalorder %s16, 1
      %p114 = por %p112, %p113
      %p116 = scmp.ne.s32.totalorder %s99, %s115
      %p117 = scmp.eq.s32.totalorder %s16, 0
      %p118 = por %p116, %p117
      %s119 = ssub.s32 %s17, %s36
      %s120 = ssub.s32 %s18, %s32
      %s121 = sor.u32 %s119, %s120
      %p122 = scmp.eq.s32.totalorder %s121, 0
      %s124 = sadd.s32 %s123, 1
      %s125 = scalar_select %p122, %s123, %s124
      %p128 = pneg %p122
      %p129 = scmp.eq.s32.totalorder %s10, 1
      %p130 = por %p128, %p129
      %p131 = scmp.ne.s32.totalorder %s123, %s126
      %p132 = scmp.eq.s32.totalorder %s10, 0
      %p133 = por %p131, %p132
      %p134 = scmp.ne.s32.totalorder %s123, %s126
      %p135 = scmp.eq.s32.totalorder %s15, 1
      %p136 = por %p134, %p135
      %p137 = scmp.ne.s32.totalorder %s126, %s127
      %p138 = scmp.eq.s32.totalorder %s15, 0
      %p139 = por %p137, %p138
      %p140 = scmp.ne.s32.totalorder %s126, %s127
      %p141 = scmp.eq.s32.totalorder %s16, 1
      %p142 = por %p140, %p141
      %p144 = scmp.ne.s32.totalorder %s127, %s143
      %p145 = scmp.eq.s32.totalorder %s16, 0
      %p146 = por %p144, %p145
      %p147 = scmp.le.s32.totalorder 1, %s10
      %p148 = scmp.lt.s32.totalorder %s10, 3
      %p149 = pnand %p147, %p148
      %p150 = pneg %p149
      // Predicated region
      $region9: #{base_model_forward.1} parent=5 // pred_check
        _
      $region10: #{base_model_forward.1} parent=5 // pred_check_branch
        %152 = sbr.rel (%p149) target = $region12
      $region11: #{base_model_forward.1} parent=5 // pred_region
        %s153 = ssub.s32 %s10, 1
        // Predicated region
        $region13: #{base_model_forward.1} parent=11 // pred_check
          %p154 = pneg %p111
        $region14: #{base_model_forward.1} parent=11 // pred_check_branch
          %156 = sbr.rel (%p154) target = $region16
        $region15: #{base_model_forward.1} parent=11 // pred_region
          %s157 = smul.u32 2, %s21
          %p158 = scmp.lt.s32.totalorder %s157, 1
          %s159 = scalar_select %p158, %s157, 1
          %s160 = scalar_lea.vmem %s2, %s159
          %s161 = smul.u32 2, %s21
        $region16: #{base_model_forward.1} parent=11 // pred_fallthru
          _
      $region12: #{base_model_forward.1} parent=5 // pred_fallthru
        _
      %p162 = scmp.lt.s32.totalorder %s10, 2
      // Predicated region
      $region17: #{base_model_forward.1} parent=5 // pred_check
        %p163 = pneg %p162
      $region18: #{base_model_forward.1} parent=5 // pred_check_branch
        %165 = sbr.rel (%p163) target = $region20
      $region19: #{base_model_forward.1} parent=5 // pred_region
        // Predicated region
        $region21: #{base_model_forward.1} parent=19 // pred_check
          %p166 = pneg %p51
        $region22: #{base_model_forward.1} parent=19 // pred_check_branch
          %168 = sbr.rel (%p166) target = $region24
        $region23: #{base_model_forward.1} parent=19 // pred_region
          %s169 = smul.u32 2, %s19
          %p170 = scmp.lt.s32.totalorder %s17, 0
          %s171 = scalar_select %p170, %s17, 0
          %p172 = scmp.lt.s32.totalorder %s169, 3
          %s173 = scalar_select %p172, %s169, 3
          %s174 = smul.addr %s171, 4
          %s175 = sadd.s32 %s173, %s174
          %s176 = smul.addr %s175, 8
          %s177 = scalar_lea.vmem %s0, %s176
          %s178 = smul.u32 2, %s19
        $region24: #{base_model_forward.1} parent=19 // pred_fallthru
          _
        // Predicated region
        $region25: #{base_model_forward.1} parent=19 // pred_check
          %p179 = pneg %p79
        $region26: #{base_model_forward.1} parent=19 // pred_check_branch
          %181 = sbr.rel (%p179) target = $region28
        $region27: #{base_model_forward.1} parent=19 // pred_region
          %s182 = smul.u32 32, %s19
          %s183 = smul.u32 2, %s18
          %p184 = scmp.lt.s32.totalorder %s182, 63
          %s185 = scalar_select %p184, %s182, 63
          %p186 = scmp.lt.s32.totalorder %s183, 1
          %s187 = scalar_select %p186, %s183, 1
          %s188 = smul.addr %s185, 2
          %s189 = sadd.s32 %s187, %s188
          %s190 = smul.addr %s189, 8
          %s191 = scalar_lea.vmem %s1, %s190
          %s192 = smul.u32 32, %s19
          %s193 = smul.u32 2, %s18
        $region28: #{base_model_forward.1} parent=19 // pred_fallthru
          _
      $region20: #{base_model_forward.1} parent=5 // pred_fallthru
        _
      %p194 = scmp.le.s32.totalorder 1, %s10
      %p195 = scmp.lt.s32.totalorder %s10, 3
      %p196 = pnand %p194, %p195
      %p197 = pneg %p196
      // Predicated region
      $region29: #{base_model_forward.1} parent=5 // pred_check
        _
      $region30: #{base_model_forward.1} parent=5 // pred_check_branch
        %199 = sbr.rel (%p196) target = $region32
      $region31: #{base_model_forward.1} parent=5 // pred_region
        %s200 = ssub.s32 %s10, 1
        %s201 = smul.u32 2, %s22
        %p202 = scmp.lt.s32.totalorder %s20, 0
        %s203 = scalar_select %p202, %s20, 0
        %p204 = scmp.lt.s32.totalorder %s201, 3
        %s205 = scalar_select %p204, %s201, 3
        %s206 = smul.addr %s203, 4
        %s207 = sadd.s32 %s205, %s206
        %s208 = smul.addr %s207, 8
        %s209 = scalar_lea.vmem %s0, %s208
        %p210 = pneg %p57
        %p211 = pneg %p54
        %s212 = smul.u32 32, %s22
        %s213 = smul.u32 2, %s21
        %p214 = scmp.lt.s32.totalorder %s212, 63
        %s215 = scalar_select %p214, %s212, 63
        %p216 = scmp.lt.s32.totalorder %s213, 1
        %s217 = scalar_select %p216, %s213, 1
        %s218 = smul.addr %s215, 2
        %s219 = sadd.s32 %s217, %s218
        %s220 = smul.addr %s219, 8
        %s221 = scalar_lea.vmem %s1, %s220
        %p222 = pneg %p85
        %p223 = pneg %p82
        %s224 = smul.u32 2, %s21
        %p225 = scmp.lt.s32.totalorder %s224, 1
        %s226 = scalar_select %p225, %s224, 1
        %s227 = scalar_lea.vmem %s2, %s226
        %p228 = pneg %p111
        %p229 = pneg %p108
        %p230 = pneg %p139
        %p231 = pneg %p136
        %s232 = smul.u32 2, %s22
        %p233 = scmp.lt.s32.totalorder %s20, 0
        %s234 = scalar_select %p233, %s20, 0
        %p235 = scmp.lt.s32.totalorder %s232, 3
        %s236 = scalar_select %p235, %s232, 3
        %s237 = smul.addr %s234, 4
        %s238 = sadd.s32 %s236, %s237
        %s239 = smul.addr %s238, 8
        %s240 = scalar_lea.vmem %s0, %s239
        %s241 = smul.u32 2, %s22
        %s242 = smul.u32 32, %s22
        %s243 = smul.u32 2, %s21
        %p244 = scmp.lt.s32.totalorder %s242, 63
        %s245 = scalar_select %p244, %s242, 63
        %p246 = scmp.lt.s32.totalorder %s243, 1
        %s247 = scalar_select %p246, %s243, 1
        %s248 = smul.addr %s245, 2
        %s249 = sadd.s32 %s247, %s248
        %s250 = smul.addr %s249, 8
        %s251 = scalar_lea.vmem %s1, %s250
        %s252 = smul.u32 32, %s22
        %s253 = smul.u32 2, %s21
        %s254 = smul.u32 2, %s21
        %p255 = scmp.lt.s32.totalorder %s254, 1
        %s256 = scalar_select %p255, %s254, 1
        %s257 = scalar_lea.vmem %s2, %s256
        %s258 = smul.u32 2, %s21
        %s259 = smul.u32 2, %s21
        %p260 = scmp.eq.s32.totalorder %s22, 0
        // Predicated region
        $region33: #{base_model_forward.1} parent=31 // pred_check
          %p261 = pneg %p260
        $region34: #{base_model_forward.1} parent=31 // pred_check_branch
          %263 = sbr.rel (%p261) target = $region36
        $region35: #{base_model_forward.1} parent=31 // pred_region
          %264 = vst [vmem:[#allocation2] sm:$0xff] 0.0
          %265 = vst [vmem:[#allocation2 + $0x8] sm:$0xff] 0.0
        $region36: #{base_model_forward.1} parent=31 // pred_fallthru
          _
        %v266 = vld [vmem:[#allocation2] sm:$0xff]
        %v267 = vld [vmem:[#allocation2 + $0x8] sm:$0xff]
        %v268 = vld [vmem:[%s240] sm:$0xff]
        %v269 = vld [vmem:[%s240 + $0x8] sm:$0xff]
        %v270 = vld [vmem:[%s251] sm:$0xff]
        %v271 = vld [vmem:[%s251 + $0x8] sm:$0xff]
        %v272 = vld [vmem:[%s251 + $0x10] sm:$0xff]
        %v273 = vld [vmem:[%s251 + $0x18] sm:$0xff]
        %v274 = vld [vmem:[%s251 + $0x20] sm:$0xff]
        %v275 = vld [vmem:[%s251 + $0x28] sm:$0xff]
        %v276 = vld [vmem:[%s251 + $0x30] sm:$0xff]
        %v277 = vld [vmem:[%s251 + $0x38] sm:$0xff]
        %v278 = vld [vmem:[%s251 + $0x40] sm:$0xff]
        %v279 = vld [vmem:[%s251 + $0x48] sm:$0xff]
        %v280 = vld [vmem:[%s251 + $0x50] sm:$0xff]
        %v281 = vld [vmem:[%s251 + $0x58] sm:$0xff]
        %v282 = vld [vmem:[%s251 + $0x60] sm:$0xff]
        %v283 = vld [vmem:[%s251 + $0x68] sm:$0xff]
        %v284 = vld [vmem:[%s251 + $0x70] sm:$0xff]
        %v285 = vld [vmem:[%s251 + $0x78] sm:$0xff]
        %v286 = vld [vmem:[%s251 + $0x80] sm:$0xff]
        %v287 = vld [vmem:[%s251 + $0x88] sm:$0xff]
        %v288 = vld [vmem:[%s251 + $0x90] sm:$0xff]
        %v289 = vld [vmem:[%s251 + $0x98] sm:$0xff]
        %v290 = vld [vmem:[%s251 + $0xa0] sm:$0xff]
        %v291 = vld [vmem:[%s251 + $0xa8] sm:$0xff]
        %v292 = vld [vmem:[%s251 + $0xb0] sm:$0xff]
        %v293 = vld [vmem:[%s251 + $0xb8] sm:$0xff]
        %v294 = vld [vmem:[%s251 + $0xc0] sm:$0xff]
        %v295 = vld [vmem:[%s251 + $0xc8] sm:$0xff]
        %v296 = vld [vmem:[%s251 + $0xd0] sm:$0xff]
        %v297 = vld [vmem:[%s251 + $0xd8] sm:$0xff]
        %v298 = vld [vmem:[%s251 + $0xe0] sm:$0xff]
        %v299 = vld [vmem:[%s251 + $0xe8] sm:$0xff]
        %v300 = vld [vmem:[%s251 + $0xf0] sm:$0xff]
        %v301 = vld [vmem:[%s251 + $0xf8] sm:$0xff]
        %v302 = vld [vmem:[%s251 + $0x100] sm:$0xff]
        %v303 = vld [vmem:[%s251 + $0x108] sm:$0xff]
        %v304 = vld [vmem:[%s251 + $0x110] sm:$0xff]
        %v305 = vld [vmem:[%s251 + $0x118] sm:$0xff]
        %v306 = vld [vmem:[%s251 + $0x120] sm:$0xff]
        %v307 = vld [vmem:[%s251 + $0x128] sm:$0xff]
        %v308 = vld [vmem:[%s251 + $0x130] sm:$0xff]
        %v309 = vld [vmem:[%s251 + $0x138] sm:$0xff]
        %v310 = vld [vmem:[%s251 + $0x140] sm:$0xff]
        %v311 = vld [vmem:[%s251 + $0x148] sm:$0xff]
        %v312 = vld [vmem:[%s251 + $0x150] sm:$0xff]
        %v313 = vld [vmem:[%s251 + $0x158] sm:$0xff]
        %v314 = vld [vmem:[%s251 + $0x160] sm:$0xff]
        %v315 = vld [vmem:[%s251 + $0x168] sm:$0xff]
        %v316 = vld [vmem:[%s251 + $0x170] sm:$0xff]
        %v317 = vld [vmem:[%s251 + $0x178] sm:$0xff]
        %v318 = vld [vmem:[%s251 + $0x180] sm:$0xff]
        %v319 = vld [vmem:[%s251 + $0x188] sm:$0xff]
        %v320 = vld [vmem:[%s251 + $0x190] sm:$0xff]
        %v321 = vld [vmem:[%s251 + $0x198] sm:$0xff]
        %v322 = vld [vmem:[%s251 + $0x1a0] sm:$0xff]
        %v323 = vld [vmem:[%s251 + $0x1a8] sm:$0xff]
        %v324 = vld [vmem:[%s251 + $0x1b0] sm:$0xff]
        %v325 = vld [vmem:[%s251 + $0x1b8] sm:$0xff]
        %v326 = vld [vmem:[%s251 + $0x1c0] sm:$0xff]
        %v327 = vld [vmem:[%s251 + $0x1c8] sm:$0xff]
        %v328 = vld [vmem:[%s251 + $0x1d0] sm:$0xff]
        %v329 = vld [vmem:[%s251 + $0x1d8] sm:$0xff]
        %v330 = vld [vmem:[%s251 + $0x1e0] sm:$0xff]
        %v331 = vld [vmem:[%s251 + $0x1e8] sm:$0xff]
        %v332 = vld [vmem:[%s251 + $0x1f0] sm:$0xff]
        %v333 = vld [vmem:[%s251 + $0x1f8] sm:$0xff]
        %334 = vmatprep.subr.mxu0 %v271
        %335 = vmatpush1.msra.mxu0 %v270
        %336 = vmatprep.subr.mxu0 %v273
        %337 = vmatpush1.msra.mxu0 %v272
        %338 = vmatprep.subr.mxu0 %v275
        %339 = vmatpush1.msra.mxu0 %v274
        %340 = vmatprep.subr.mxu0 %v277
        %341 = vmatpush1.msra.mxu0 %v276
        %342 = vmatprep.subr.mxu0 %v279
        %343 = vmatpush1.msra.mxu0 %v278
        %344 = vmatprep.subr.mxu0 %v281
        %345 = vmatpush1.msra.mxu0 %v280
        %346 = vmatprep.subr.mxu0 %v283
        %347 = vmatpush1.msra.mxu0 %v282
        %348 = vmatprep.subr.mxu0 %v285
        %349 = vmatpush1.msra.mxu0 %v284
        %350 = vmatprep.subr.mxu0 %v287
        %351 = vmatpush1.msra.mxu0 %v286
        %352 = vmatprep.subr.mxu0 %v289
        %353 = vmatpush1.msra.mxu0 %v288
        %354 = vmatprep.subr.mxu0 %v291
        %355 = vmatpush1.msra.mxu0 %v290
        %356 = vmatprep.subr.mxu0 %v293
        %357 = vmatpush1.msra.mxu0 %v292
        %358 = vmatprep.subr.mxu0 %v295
        %359 = vmatpush1.msra.mxu0 %v294
        %360 = vmatprep.subr.mxu0 %v297
        %361 = vmatpush1.msra.mxu0 %v296
        %362 = vmatprep.subr.mxu0 %v299
        %363 = vmatpush1.msra.mxu0 %v298
        %364 = vmatprep.subr.mxu0 %v301
        %365 = vmatpush1.msra.mxu0 %v300
        %366 = vmatprep.subr.mxu0 %v303
        %367 = vmatpush1.msra.mxu0 %v302
        %368 = vmatprep.subr.mxu0 %v305
        %369 = vmatpush1.msra.mxu0 %v304
        %370 = vmatprep.subr.mxu0 %v307
        %371 = vmatpush1.msra.mxu0 %v306
        %372 = vmatprep.subr.mxu0 %v309
        %373 = vmatpush1.msra.mxu0 %v308
        %374 = vmatprep.subr.mxu0 %v311
        %375 = vmatpush1.msra.mxu0 %v310
        %376 = vmatprep.subr.mxu0 %v313
        %377 = vmatpush1.msra.mxu0 %v312
        %378 = vmatprep.subr.mxu0 %v315
        %379 = vmatpush1.msra.mxu0 %v314
        %380 = vmatprep.subr.mxu0 %v317
        %381 = vmatpush1.msra.mxu0 %v316
        %382 = vmatprep.subr.mxu0 %v319
        %383 = vmatpush1.msra.mxu0 %v318
        %384 = vmatprep.subr.mxu0 %v321
        %385 = vmatpush1.msra.mxu0 %v320
        %386 = vmatprep.subr.mxu0 %v323
        %387 = vmatpush1.msra.mxu0 %v322
        %388 = vmatprep.subr.mxu0 %v325
        %389 = vmatpush1.msra.mxu0 %v324
        %390 = vmatprep.subr.mxu0 %v327
        %391 = vmatpush1.msra.mxu0 %v326
        %392 = vmatprep.subr.mxu0 %v329
        %393 = vmatpush1.msra.mxu0 %v328
        %394 = vmatprep.subr.mxu0 %v331
        %395 = vmatpush1.msra.mxu0 %v330
        %396 = vmatprep.subr.mxu0 %v333
        %397 = vmatpush1.msra.mxu0 %v332
        %398 = vmatprep.mubr.f32.mxu0 %v269
        %399 = vmatmul.mubr.f32.gmra.mrb[0].mxu0 %v268
        %v400 = vpop.f32.mrb[0].mxu0
        %v401 = vadd.f32 0.0, %v400
        %v402 = vpop.f32.mrb[0].mxu0
        %v403 = vadd.f32 0.0, %v402
        %404 = vdwg.mxu0
        %v405 = vadd.f32 %v266, %v401
        %v406 = vadd.f32 %v267, %v403
        %407 = vst [vmem:[#allocation2] sm:$0xff] %v405
        %408 = vst [vmem:[#allocation2 + $0x8] sm:$0xff] %v406
        %p409 = scmp.eq.s32.totalorder %s22, 1
        // Predicated region
        $region37: #{base_model_forward.1} parent=31 // pred_check
          %p410 = pneg %p409
        $region38: #{base_model_forward.1} parent=31 // pred_check_branch
          %412 = sbr.rel (%p410) target = $region40
        $region39: #{base_model_forward.1} parent=31 // pred_region
          %v413 = vld [vmem:[#allocation2] sm:$0xff]
          %v414 = vld [vmem:[#allocation2 + $0x8] sm:$0xff]
          %v415 = vld [vmem:[%s257] sm:$0x3]
          %v417 = vlaneseq
          %v418 = vshrl.u32 %v417, 7
          %v419 = vsub.s32 0, %v418
          %v420 = vrot.slane %v415, %v419
          %v421 = vlaneseq
          %v422 = vshrl.u32 %v421, 7
          %v423 = vsub.s32 1, %v422
          %v424 = vrot.slane %v415, %v423
          %v427 = vadd.f32 %v413, %v420
          %v428 = vadd.f32 %v414, %v424
          %v429 = vmax.f32 %v427, 0.0
          %v430 = vmax.f32 %v428, 0.0
          %431 = vst [vmem:[#allocation3] sm:$0xff] %v429
          %432 = vst [vmem:[#allocation3 + $0x8] sm:$0xff] %v430
        $region40: #{base_model_forward.1} parent=31 // pred_fallthru
          _
        // Predicated region
        $region41: #{base_model_forward.1} parent=31 // pred_check
          %p433 = pneg %p136
        $region42: #{base_model_forward.1} parent=31 // pred_check_branch
          %435 = sbr.rel (%p433) target = $region44
        $region43: #{base_model_forward.1} parent=31 // pred_region
          %s436 = smul.u32 2, %s21
          %s438 = ssub.s32 256, 256
          %439 = vsyncadd [#allocation4], %s438
          %s440 = smul.addr %s20, 2
          %s441 = sadd.s32 %s436, %s440
          %s442 = smul.addr %s441, 128
          %s443 = scalar_lea.hbm %s3, %s442
          %s445 = sshll.u32 [#allocation3], 4
          %s446 = int_to_ptr.vmem [resolvable:$true] %s445
          %448 = dma.vmem_to_hbm [thread:$0]  %s446, 256, %s443, [#allocation4]
        $region44: #{base_model_forward.1} parent=31 // pred_fallthru
          _
        // Predicated region
        $region45: #{base_model_forward.1} parent=31 // pred_check
          %p449 = pneg %p136
        $region46: #{base_model_forward.1} parent=31 // pred_check_branch
          %451 = sbr.rel (%p449) target = $region48
        $region47: #{base_model_forward.1} parent=31 // pred_region
          %452 = dma.done [#allocation4], 256
        $region48: #{base_model_forward.1} parent=31 // pred_fallthru
          _
      $region32: #{base_model_forward.1} parent=5 // pred_fallthru
        _
      %p453 = scmp.le.s32.totalorder 2, %s10
      // Predicated region
      $region49: #{base_model_forward.1} parent=5 // pred_check
        %p454 = pneg %p453
      $region50: #{base_model_forward.1} parent=5 // pred_check_branch
        %456 = sbr.rel (%p454) target = $region52
      $region51: #{base_model_forward.1} parent=5 // pred_region
        %s457 = ssub.s32 %s10, 2
      $region52: #{base_model_forward.1} parent=5 // pred_fallthru
        _
    $region6: #{base_model_forward.1} parent=1 // loop_footer
      %s14 = sadd.s32 1, %s10
    $region7: #{base_model_forward.1} parent=1 // loop_footer_branch
      %9 = sbr.rel target = $region3
    $region8: #{base_model_forward.1} parent=1 // loop_exit
      _
    %458 = vsyncpa [#allocation4], 1
    %s459 = scalar_lea.sflag [#allocation4], 1
    %460 = vsyncpa %s459, 1

</llo_original>
